<compile_context>
chip_gen: v5e
topology: v5e:2x2
jax: 0.10.0
libtpu: 0.0.40
codegen_flags: <defaults>
</compile_context>

<pallas_src>
import math

import jax
import jax.numpy as jnp
from jax.experimental import pallas as pl
from jax.experimental.pallas import tpu as pltpu


def _mlp_kernel(x_ref, w1_ref, b1_ref, w2_ref, b2_ref, w3_ref, b3_ref,
                w4_ref, b4_ref, o_ref):
    cd = x_ref.dtype  # matmul operand dtype (f32 or bf16); accumulate in f32
    # hidden1 + ReLU
    h = jnp.dot(x_ref[...], w1_ref[...], preferred_element_type=jnp.float32)
    h = jnp.maximum(h + b1_ref[...], 0.0)
    # hidden2 + ReLU
    h = jnp.dot(h.astype(cd), w2_ref[...], preferred_element_type=jnp.float32)
    h = jnp.maximum(h + b2_ref[...], 0.0)
    # hidden3 + ReLU  (tiny N: MXU mostly idle but essentially free here)
    h = jnp.dot(h.astype(cd), w3_ref[...], preferred_element_type=jnp.float32)
    h = jnp.maximum(h + b3_ref[...], 0.0)
    # output (no activation)
    h = jnp.dot(h.astype(cd), w4_ref[...], preferred_element_type=jnp.float32)
    o_ref[...] = (h + b4_ref[...]).astype(o_ref.dtype)


def _round_up(n, m):
    return ((n + m - 1) // m) * m


def multiclass_forward(x, params, *, tile_b=4096):
    """x: (B, 51) float32 or bfloat16. params: (in,out) weights, (1,out) biases.

    The matmul-operand dtype follows x.dtype (supply bf16 x from the producer
    for full MXU rate and a halved x HBM stream on v6e/v7x — no wrapper cast
    is performed).  Bias-add / ReLU always run in f32; accumulation is f32.
    Output is float32, shape (B, 2).
    """
    B, F = x.shape
    n_out = params["w4"].shape[1]
    cd = x.dtype                                      # matmul operand dtype
    itemsize = jnp.dtype(cd).itemsize

    # Weights cast (tiny, one-off) to match x's operand dtype; biases stay f32.
    w1 = params["w1"].astype(cd)
    w2 = params["w2"].astype(cd)
    w3 = params["w3"].astype(cd)
    w4 = params["w4"].astype(cd)
    b1, b2, b3, b4 = params["b1"], params["b2"], params["b3"], params["b4"]

    # ---- tile_b selection -------------------------------------------------
    lane = 128
    # Every activation / the output tile is lane-padded to 128 in VMEM; per-row
    # VMEM cost ~ x(2 bufs) + out(2 bufs, f32) + 3 f32 intermediates.
    per_row_vmem = lane * (2 * itemsize + 2 * 4 + 3 * 4)
    max_rows_vmem = max(8, ((40 << 20) // per_row_vmem) // 8 * 8)
    tile_b = min(tile_b, max_rows_vmem)
    # Don't over-tile tiny batches; keep the sublane dim a multiple of 8.
    tile_b = max(8, min(tile_b, _round_up(B, 8)))
    # Ensure >= 2 grid steps when the batch allows it, so v7x's two
    # TensorCores both get work (cheap no-op cost on v5e/v6e).
    if B >= 16 and pl.cdiv(B, tile_b) < 2:
        tile_b = max(8, _round_up(pl.cdiv(B, 2), 8))
    n_tiles = pl.cdiv(B, tile_b)

    # ---- specs ------------------------------------------------------------
    # x / out: tiled over batch (double-buffered DMA pipeline); the last,
    # possibly partial block relies on Pallas edge handling (OOB input rows
    # are garbage but inert — rows are independent; OOB output rows masked).
    x_spec = pl.BlockSpec((tile_b, F), lambda i: (i, 0))
    resident = lambda a: pl.BlockSpec(a.shape, lambda i: (0, 0))
    out_spec = pl.BlockSpec((tile_b, n_out), lambda i: (i, 0))

    # ---- cost / VMEM hints --------------------------------------------------
    l1, l2, l3 = w1.shape[1], w2.shape[1], w3.shape[1]
    flops = 2 * B * (F * l1 + l1 * l2 + l2 * l3 + l3 * n_out)
    weight_bytes = sum(int(a.size) * a.dtype.itemsize
                       for a in (w1, b1, w2, b2, w3, b3, w4, b4))
    bytes_accessed = B * F * itemsize + B * n_out * 4 + weight_bytes

    vmem_limit = int(min(
        max(int(1.25 * tile_b * per_row_vmem) + 4 * weight_bytes + (2 << 20),
            32 << 20),
        56 << 20))

    out = pl.pallas_call(
        _mlp_kernel,
        out_shape=jax.ShapeDtypeStruct((B, n_out), jnp.float32),
        grid=(n_tiles,),
        in_specs=[x_spec,
                  resident(w1), resident(b1),
                  resident(w2), resident(b2),
                  resident(w3), resident(b3),
                  resident(w4), resident(b4)],
        out_specs=out_spec,
        compiler_params=pltpu.CompilerParams(
            dimension_semantics=("parallel",),
            vmem_limit_bytes=vmem_limit),
        cost_estimate=pl.CostEstimate(
            flops=flops, transcendentals=0, bytes_accessed=bytes_accessed),
    )(x, w1, b1, w2, b2, w3, b3, w4, b4)

    return out


def _kaiming_uniform(key, fan_in, fan_out):
    # kaiming_uniform_ with nonlinearity='relu': bound = sqrt(6 / fan_in)
    bound = math.sqrt(6.0 / fan_in)
    # stored as (in, out) — PyTorch's (out, in) transposed
    return jax.random.uniform(key, (fan_in, fan_out), jnp.float32, -bound, bound)


def _xavier_uniform(key, fan_in, fan_out):
    bound = math.sqrt(6.0 / (fan_in + fan_out))
    return jax.random.uniform(key, (fan_in, fan_out), jnp.float32, -bound, bound)


def init_params(key, l1=128, l2=32, l3=8):
    k1, k2, k3, k4 = jax.random.split(key, 4)
    return {
        "w1": _kaiming_uniform(k1, 51, l1), "b1": jnp.zeros((1, l1), jnp.float32),
        "w2": _kaiming_uniform(k2, l1, l2), "b2": jnp.zeros((1, l2), jnp.float32),
        "w3": _kaiming_uniform(k3, l2, l3), "b3": jnp.zeros((1, l3), jnp.float32),
        "w4": _xavier_uniform(k4, l3, 2),   "b4": jnp.zeros((1, 2), jnp.float32),
    }


def _reference(x, p):
    h = jnp.maximum(x @ p["w1"] + p["b1"], 0.0)
    h = jnp.maximum(h @ p["w2"] + p["b2"], 0.0)
    h = jnp.maximum(h @ p["w3"] + p["b3"], 0.0)
    return h @ p["w4"] + p["b4"]


if __name__ == "__main__":
    key = jax.random.PRNGKey(0)
    kx, kx2, kp = jax.random.split(key, 3)
    params = init_params(kp)

    # Small batch (matches original module usage): single tile, f32, exact.
    x_small = jax.random.normal(kx, (8, 51), jnp.float32)
    out = jax.block_until_ready(multiclass_forward(x_small, params))
    ref = _reference(x_small, params)
    assert out.shape == (8, 2)
    assert jnp.allclose(out, ref, atol=1e-5, rtol=1e-5)

    # Ragged batch, explicit small tile: multi-tile grid + partial last block
    # (no wrapper-side pad), f32 exact.
    x_big = jax.random.normal(kx2, (300, 51), jnp.float32)
    out_big = jax.block_until_ready(
        multiclass_forward(x_big, params, tile_b=128))
    ref_big = _reference(x_big, params)
    assert out_big.shape == (300, 2)
    assert jnp.allclose(out_big, ref_big, atol=1e-5, rtol=1e-5)

    # Default (large) tile path: auto-split into 2 tiles for v7x megacore,
    # both with partial edges.
    out_def = jax.block_until_ready(multiclass_forward(x_big, params))
    assert out_def.shape == (300, 2)
    assert jnp.allclose(out_def, ref_big, atol=1e-5, rtol=1e-5)

    # bf16 x supplied by the producer (no wrapper cast): bf16 MXU operands,
    # f32 accumulation / epilogue. Looser tolerance.
    x_bf16 = x_big.astype(jnp.bfloat16)
    out_bf16 = jax.block_until_ready(
        multiclass_forward(x_bf16, params, tile_b=128))
    ref_bf16 = _reference(x_bf16.astype(jnp.float32), params)
    assert out_bf16.shape == (300, 2)
    assert jnp.allclose(out_bf16, ref_bf16, atol=0.1, rtol=0.1)

    print("KERNEL_OK")
</pallas_src>

<mosaic_0001>
module attributes {stable_mosaic.version = 11 : i64} {
  func.func @_mlp_kernel(%arg0: i32, %arg1: memref<8x51xf32, #tpu.memory_space<vmem>>, %arg2: memref<51x128xf32, #tpu.memory_space<vmem>>, %arg3: memref<1x128xf32, #tpu.memory_space<vmem>>, %arg4: memref<128x32xf32, #tpu.memory_space<vmem>>, %arg5: memref<1x32xf32, #tpu.memory_space<vmem>>, %arg6: memref<32x8xf32, #tpu.memory_space<vmem>>, %arg7: memref<1x8xf32, #tpu.memory_space<vmem>>, %arg8: memref<8x2xf32, #tpu.memory_space<vmem>>, %arg9: memref<1x2xf32, #tpu.memory_space<vmem>>, %arg10: memref<8x2xf32, #tpu.memory_space<vmem>>) attributes {dimension_semantics = [#tpu.dimension_semantics<parallel>], iteration_bounds = array<i64: 1>, scalar_prefetch = 0 : i64, scratch_operands = 0 : i64, tpu.core_type = #tpu.core_type<tc>, window_params = [{transform_indices = @transform_0, window_bounds = array<i64: 8, 51>}, {pipeline_mode = #tpu.pipeline_mode<synchronous>, transform_indices = @transform_1, window_bounds = array<i64: 51, 128>}, {pipeline_mode = #tpu.pipeline_mode<synchronous>, transform_indices = @transform_2, window_bounds = array<i64: 1, 128>}, {pipeline_mode = #tpu.pipeline_mode<synchronous>, transform_indices = @transform_3, window_bounds = array<i64: 128, 32>}, {pipeline_mode = #tpu.pipeline_mode<synchronous>, transform_indices = @transform_4, window_bounds = array<i64: 1, 32>}, {pipeline_mode = #tpu.pipeline_mode<synchronous>, transform_indices = @transform_5, window_bounds = array<i64: 32, 8>}, {pipeline_mode = #tpu.pipeline_mode<synchronous>, transform_indices = @transform_6, window_bounds = array<i64: 1, 8>}, {pipeline_mode = #tpu.pipeline_mode<synchronous>, transform_indices = @transform_7, window_bounds = array<i64: 8, 2>}, {pipeline_mode = #tpu.pipeline_mode<synchronous>, transform_indices = @transform_8, window_bounds = array<i64: 1, 2>}, {transform_indices = @transform_9, window_bounds = array<i64: 8, 2>}]} {
    %c0 = arith.constant 0 : index
    %c0_0 = arith.constant 0 : index
    %0 = vector.load %arg1[%c0, %c0_0] : memref<8x51xf32, #tpu.memory_space<vmem>>, vector<8x51xf32>
    %c0_1 = arith.constant 0 : index
    %c0_2 = arith.constant 0 : index
    %1 = vector.load %arg2[%c0_1, %c0_2] : memref<51x128xf32, #tpu.memory_space<vmem>>, vector<51x128xf32>
    %cst = arith.constant dense<0.000000e+00> : vector<8x128xf32>
    %2 = tpu.matmul %0, %1, %cst {dimension_numbers = #tpu.dot_dimension_numbers<[1], [0], [0], [1], [0, 0, 1, 1], [], []>} : vector<8x51xf32>, vector<51x128xf32>, vector<8x128xf32> -> vector<8x128xf32>
    %c0_3 = arith.constant 0 : index
    %c0_4 = arith.constant 0 : index
    %3 = vector.load %arg3[%c0_3, %c0_4] : memref<1x128xf32, #tpu.memory_space<vmem>>, vector<1x128xf32>
    %4 = vector.broadcast %3 : vector<1x128xf32> to vector<8x128xf32>
    %5 = arith.addf %2, %4 : vector<8x128xf32>
    %cst_5 = arith.constant 0.000000e+00 : f32
    %6 = vector.broadcast %cst_5 : f32 to vector<8x128xf32>
    %7 = arith.maximumf %5, %6 : vector<8x128xf32>
    %c0_6 = arith.constant 0 : index
    %c0_7 = arith.constant 0 : index
    %8 = vector.load %arg4[%c0_6, %c0_7] : memref<128x32xf32, #tpu.memory_space<vmem>>, vector<128x32xf32>
    %cst_8 = arith.constant dense<0.000000e+00> : vector<8x32xf32>
    %9 = tpu.matmul %7, %8, %cst_8 {dimension_numbers = #tpu.dot_dimension_numbers<[1], [0], [0], [1], [0, 0, 1, 1], [], []>} : vector<8x128xf32>, vector<128x32xf32>, vector<8x32xf32> -> vector<8x32xf32>
    %c0_9 = arith.constant 0 : index
    %c0_10 = arith.constant 0 : index
    %10 = vector.load %arg5[%c0_9, %c0_10] : memref<1x32xf32, #tpu.memory_space<vmem>>, vector<1x32xf32>
    %11 = vector.broadcast %10 : vector<1x32xf32> to vector<8x32xf32>
    %12 = arith.addf %9, %11 : vector<8x32xf32>
    %cst_11 = arith.constant 0.000000e+00 : f32
    %13 = vector.broadcast %cst_11 : f32 to vector<8x32xf32>
    %14 = arith.maximumf %12, %13 : vector<8x32xf32>
    %c0_12 = arith.constant 0 : index
    %c0_13 = arith.constant 0 : index
    %15 = vector.load %arg6[%c0_12, %c0_13] : memref<32x8xf32, #tpu.memory_space<vmem>>, vector<32x8xf32>
    %cst_14 = arith.constant dense<0.000000e+00> : vector<8x8xf32>
    %16 = tpu.matmul %14, %15, %cst_14 {dimension_numbers = #tpu.dot_dimension_numbers<[1], [0], [0], [1], [0, 0, 1, 1], [], []>} : vector<8x32xf32>, vector<32x8xf32>, vector<8x8xf32> -> vector<8x8xf32>
    %c0_15 = arith.constant 0 : index
    %c0_16 = arith.constant 0 : index
    %17 = vector.load %arg7[%c0_15, %c0_16] : memref<1x8xf32, #tpu.memory_space<vmem>>, vector<1x8xf32>
    %18 = vector.broadcast %17 : vector<1x8xf32> to vector<8x8xf32>
    %19 = arith.addf %16, %18 : vector<8x8xf32>
    %cst_17 = arith.constant 0.000000e+00 : f32
    %20 = vector.broadcast %cst_17 : f32 to vector<8x8xf32>
    %21 = arith.maximumf %19, %20 : vector<8x8xf32>
    %c0_18 = arith.constant 0 : index
    %c0_19 = arith.constant 0 : index
    %22 = vector.load %arg8[%c0_18, %c0_19] : memref<8x2xf32, #tpu.memory_space<vmem>>, vector<8x2xf32>
    %cst_20 = arith.constant dense<0.000000e+00> : vector<8x2xf32>
    %23 = tpu.matmul %21, %22, %cst_20 {dimension_numbers = #tpu.dot_dimension_numbers<[1], [0], [0], [1], [0, 0, 1, 1], [], []>} : vector<8x8xf32>, vector<8x2xf32>, vector<8x2xf32> -> vector<8x2xf32>
    %c0_21 = arith.constant 0 : index
    %c0_22 = arith.constant 0 : index
    %24 = vector.load %arg9[%c0_21, %c0_22] : memref<1x2xf32, #tpu.memory_space<vmem>>, vector<1x2xf32>
    %25 = vector.broadcast %24 : vector<1x2xf32> to vector<8x2xf32>
    %26 = arith.addf %23, %25 : vector<8x2xf32>
    %c0_23 = arith.constant 0 : index
    %c0_24 = arith.constant 0 : index
    %27 = vector.load %arg10[%c0_23, %c0_24] : memref<8x2xf32, #tpu.memory_space<vmem>>, vector<8x2xf32>
    tpu.vector_store %arg10[%c0_23, %c0_24], %26 {strides = array<i32>} : memref<8x2xf32, #tpu.memory_space<vmem>>, vector<8x2xf32>,
    return
  }
  func.func @transform_0(%arg0: i32) -> (i32, i32) {
    %c0_i32 = arith.constant 0 : i32
    %c0_i32_0 = arith.constant 0 : i32
    return %arg0, %c0_i32 : i32, i32
  }
  func.func @transform_1(%arg0: i32) -> (i32, i32) {
    %c0_i32 = arith.constant 0 : i32
    %c0_i32_0 = arith.constant 0 : i32
    %c0_i32_1 = arith.constant 0 : i32
    return %c0_i32, %c0_i32_0 : i32, i32
  }
  func.func @transform_2(%arg0: i32) -> (i32, i32) {
    %c0_i32 = arith.constant 0 : i32
    %c0_i32_0 = arith.constant 0 : i32
    %c0_i32_1 = arith.constant 0 : i32
    return %c0_i32, %c0_i32_0 : i32, i32
  }
  func.func @transform_3(%arg0: i32) -> (i32, i32) {
    %c0_i32 = arith.constant 0 : i32
    %c0_i32_0 = arith.constant 0 : i32
    %c0_i32_1 = arith.constant 0 : i32
    return %c0_i32, %c0_i32_0 : i32, i32
  }
  func.func @transform_4(%arg0: i32) -> (i32, i32) {
    %c0_i32 = arith.constant 0 : i32
    %c0_i32_0 = arith.constant 0 : i32
    %c0_i32_1 = arith.constant 0 : i32
    return %c0_i32, %c0_i32_0 : i32, i32
  }
  func.func @transform_5(%arg0: i32) -> (i32, i32) {
    %c0_i32 = arith.constant 0 : i32
    %c0_i32_0 = arith.constant 0 : i32
    %c0_i32_1 = arith.constant 0 : i32
    return %c0_i32, %c0_i32_0 : i32, i32
  }
  func.func @transform_6(%arg0: i32) -> (i32, i32) {
    %c0_i32 = arith.constant 0 : i32
    %c0_i32_0 = arith.constant 0 : i32
    %c0_i32_1 = arith.constant 0 : i32
    return %c0_i32, %c0_i32_0 : i32, i32
  }
  func.func @transform_7(%arg0: i32) -> (i32, i32) {
    %c0_i32 = arith.constant 0 : i32
    %c0_i32_0 = arith.constant 0 : i32
    %c0_i32_1 = arith.constant 0 : i32
    return %c0_i32, %c0_i32_0 : i32, i32
  }
  func.func @transform_8(%arg0: i32) -> (i32, i32) {
    %c0_i32 = arith.constant 0 : i32
    %c0_i32_0 = arith.constant 0 : i32
    %c0_i32_1 = arith.constant 0 : i32
    return %c0_i32, %c0_i32_0 : i32, i32
  }
  func.func @transform_9(%arg0: i32) -> (i32, i32) {
    %c0_i32 = arith.constant 0 : i32
    %c0_i32_0 = arith.constant 0 : i32
    return %arg0, %c0_i32 : i32, i32
  }
}

</mosaic_0001>

<llo_original>
// kernel: tpu_custom_call.1
$region0: #{tpu_custom_call.1}
  #allocation0 [shape = 'u32[]', space=smem, size = 0x4, offset = 0x4, fixed_abs, tag = 'smem constant byte address 0x4 - core index']
  #allocation1 [shape = 'u32[72,128]{1,0:T(1,128)}', space=vmem, size = 0x9000, scoped, tag = 'internal scratch']
  %s0 = inlined_call_operand.vmem [shape: f32[8,51], index: 0, kind: input, shape index: {}]
  %s1 = inlined_call_operand.vmem [shape: f32[51,128], index: 1, kind: input, shape index: {}]
  %s2 = inlined_call_operand.vmem [shape: f32[1,128], index: 2, kind: input, shape index: {}]
  %s3 = inlined_call_operand.vmem [shape: f32[128,32], index: 3, kind: input, shape index: {}]
  %s4 = inlined_call_operand.vmem [shape: f32[1,32], index: 4, kind: input, shape index: {}]
  %s5 = inlined_call_operand.vmem [shape: f32[32,8], index: 5, kind: input, shape index: {}]
  %s6 = inlined_call_operand.vmem [shape: f32[1,8], index: 6, kind: input, shape index: {}]
  %s7 = inlined_call_operand.vmem [shape: f32[8,2], index: 7, kind: input, shape index: {}]
  %s8 = inlined_call_operand.vmem [shape: f32[1,2], index: 8, kind: input, shape index: {}]
  %s9 = inlined_call_operand.vmem [shape: f32[8,2], index: 9, kind: output, shape index: {}]
  %s10 = sld [smem:[#allocation0]]
  $region46: #{tpu_custom_call.1} parent=0
    _
  %s12 = ssub.s32 1, %s10
  %s13 = scalar_select 0, %s12, %s10
  // Predicated region
  $region2: #{tpu_custom_call.1} parent=0 // pred_check
    _
  $region3: #{tpu_custom_call.1} parent=0 // pred_check_branch
    %15 = sbr.rel (0) target = $region5
  $region4: #{tpu_custom_call.1} parent=0 // pred_region
    _
  $region5: #{tpu_custom_call.1} parent=0 // pred_fallthru
    _
  // Predicated region
  $region6: #{tpu_custom_call.1} parent=0 // pred_check
    _
  $region7: #{tpu_custom_call.1} parent=0 // pred_check_branch
    %17 = sbr.rel (0) target = $region9
  $region8: #{tpu_custom_call.1} parent=0 // pred_region
    _
  $region9: #{tpu_custom_call.1} parent=0 // pred_fallthru
    _
  // Predicated region
  $region10: #{tpu_custom_call.1} parent=0 // pred_check
    _
  $region11: #{tpu_custom_call.1} parent=0 // pred_check_branch
    %19 = sbr.rel (0) target = $region13
  $region12: #{tpu_custom_call.1} parent=0 // pred_region
    _
  $region13: #{tpu_custom_call.1} parent=0 // pred_fallthru
    _
  // Predicated region
  $region14: #{tpu_custom_call.1} parent=0 // pred_check
    _
  $region15: #{tpu_custom_call.1} parent=0 // pred_check_branch
    %21 = sbr.rel (0) target = $region17
  $region16: #{tpu_custom_call.1} parent=0 // pred_region
    _
  $region17: #{tpu_custom_call.1} parent=0 // pred_fallthru
    _
  // Predicated region
  $region18: #{tpu_custom_call.1} parent=0 // pred_check
    _
  $region19: #{tpu_custom_call.1} parent=0 // pred_check_branch
    %23 = sbr.rel (0) target = $region21
  $region20: #{tpu_custom_call.1} parent=0 // pred_region
    _
  $region21: #{tpu_custom_call.1} parent=0 // pred_fallthru
    _
  // Predicated region
  $region22: #{tpu_custom_call.1} parent=0 // pred_check
    _
  $region23: #{tpu_custom_call.1} parent=0 // pred_check_branch
    %25 = sbr.rel (0) target = $region25
  $region24: #{tpu_custom_call.1} parent=0 // pred_region
    _
  $region25: #{tpu_custom_call.1} parent=0 // pred_fallthru
    _
  // Predicated region
  $region26: #{tpu_custom_call.1} parent=0 // pred_check
    _
  $region27: #{tpu_custom_call.1} parent=0 // pred_check_branch
    %27 = sbr.rel (0) target = $region29
  $region28: #{tpu_custom_call.1} parent=0 // pred_region
    _
  $region29: #{tpu_custom_call.1} parent=0 // pred_fallthru
    _
  // Predicated region
  $region30: #{tpu_custom_call.1} parent=0 // pred_check
    _
  $region31: #{tpu_custom_call.1} parent=0 // pred_check_branch
    %29 = sbr.rel (0) target = $region33
  $region32: #{tpu_custom_call.1} parent=0 // pred_region
    _
  $region33: #{tpu_custom_call.1} parent=0 // pred_fallthru
    _
  // Predicated region
  $region34: #{tpu_custom_call.1} parent=0 // pred_check
    _
  $region35: #{tpu_custom_call.1} parent=0 // pred_check_branch
    %31 = sbr.rel (0) target = $region37
  $region36: #{tpu_custom_call.1} parent=0 // pred_region
    _
  $region37: #{tpu_custom_call.1} parent=0 // pred_fallthru
    _
  %v32 = vld [vmem:[%s0] sm:$0xff]
  %v33 = vld [vmem:[%s1] sm:$0xff]
  %v34 = vld [vmem:[%s1 + $0x8] sm:$0xff]
  %v35 = vld [vmem:[%s1 + $0x10] sm:$0xff]
  %v36 = vld [vmem:[%s1 + $0x18] sm:$0xff]
  %v37 = vld [vmem:[%s1 + $0x20] sm:$0xff]
  %v38 = vld [vmem:[%s1 + $0x28] sm:$0xff]
  %v39 = vld [vmem:[%s1 + $0x30] sm:$0x7]
  %v40 = vld [vmem:[%s2] sm:$0x1]
  %v42 = vperm.slane %v40, 0
  %vm44 = vcmask 416768
  %v46 = vsel %vm44, %v32, 0
  %vm48 = vcmask 1042432
  %v50 = vsel %vm48, %v39, 0
  %52 = vmatpush.msra.mxu0 0.0
  %53 = vmatpush.msra.mxu0 0.0
  %54 = vmatpush.msra.mxu0 0.0
  %55 = vmatpush.msra.mxu0 0.0
  %56 = vmatpush.msra.mxu0 0.0
  %57 = vmatpush.msra.mxu0 0.0
  %58 = vmatpush.msra.mxu0 0.0
  %59 = vmatpush.msra.mxu0 0.0
  %60 = vmatpush.msra.mxu0 0.0
  %61 = vmatpush.msra.mxu0 %v50
  %62 = vmatpush.msra.mxu0 %v38
  %63 = vmatpush.msra.mxu0 %v37
  %64 = vmatpush.msra.mxu0 %v36
  %65 = vmatpush.msra.mxu0 %v35
  %66 = vmatpush.msra.mxu0 %v34
  %67 = vmatpush.msra.mxu0 %v33
  %68 = vmatmul.f32.gmra.mxu0 %v46
  %v69 = vpop.f32.mrf.mxu0
  %v70 = vadd.f32 %v42, %v69
  %71 = vdwg.mxu0
  %v72 = vmax.f32 %v70, 0.0
  %v73 = vld [vmem:[%s3] sm:$0xff]
  %v74 = vld [vmem:[%s3 + $0x8] sm:$0xff]
  %v75 = vld [vmem:[%s3 + $0x10] sm:$0xff]
  %v76 = vld [vmem:[%s3 + $0x18] sm:$0xff]
  %v77 = vld [vmem:[%s3 + $0x20] sm:$0xff]
  %v78 = vld [vmem:[%s3 + $0x28] sm:$0xff]
  %v79 = vld [vmem:[%s3 + $0x30] sm:$0xff]
  %v80 = vld [vmem:[%s3 + $0x38] sm:$0xff]
  %v81 = vld [vmem:[%s3 + $0x40] sm:$0xff]
  %v82 = vld [vmem:[%s3 + $0x48] sm:$0xff]
  %v83 = vld [vmem:[%s3 + $0x50] sm:$0xff]
  %v84 = vld [vmem:[%s3 + $0x58] sm:$0xff]
  %v85 = vld [vmem:[%s3 + $0x60] sm:$0xff]
  %v86 = vld [vmem:[%s3 + $0x68] sm:$0xff]
  %v87 = vld [vmem:[%s3 + $0x70] sm:$0xff]
  %v88 = vld [vmem:[%s3 + $0x78] sm:$0xff]
  %v89 = vld [vmem:[%s4] sm:$0x1]
  %v91 = vperm.slane %v89, 0
  %93 = vmatpush.msra.mxu0 %v88
  %94 = vmatpush.msra.mxu0 %v87
  %95 = vmatpush.msra.mxu0 %v86
  %96 = vmatpush.msra.mxu0 %v85
  %97 = vmatpush.msra.mxu0 %v84
  %98 = vmatpush.msra.mxu0 %v83
  %99 = vmatpush.msra.mxu0 %v82
  %100 = vmatpush.msra.mxu0 %v81
  %101 = vmatpush.msra.mxu0 %v80
  %102 = vmatpush.msra.mxu0 %v79
  %103 = vmatpush.msra.mxu0 %v78
  %104 = vmatpush.msra.mxu0 %v77
  %105 = vmatpush.msra.mxu0 %v76
  %106 = vmatpush.msra.mxu0 %v75
  %107 = vmatpush.msra.mxu0 %v74
  %108 = vmatpush.msra.mxu0 %v73
  %109 = vmatmul.f32.gmra.mxu0 %v72
  %v110 = vpop.f32.mrf.mxu0
  %v111 = vadd.f32 %v91, %v110
  %112 = vdwg.mxu0
  %v113 = vmax.f32 %v111, 0.0
  %v114 = vld [vmem:[%s5] sm:$0xff]
  %v115 = vld [vmem:[%s5 + $0x8] sm:$0xff]
  %v116 = vld [vmem:[%s5 + $0x10] sm:$0xff]
  %v117 = vld [vmem:[%s5 + $0x18] sm:$0xff]
  %v118 = vld [vmem:[%s6] sm:$0x1]
  %v120 = vperm.slane %v118, 0
  %vm122 = vcmask 261120
  %v124 = vsel %vm122, %v113, 0
  %126 = vmatpush.msra.mxu0 0.0
  %127 = vmatpush.msra.mxu0 0.0
  %128 = vmatpush.msra.mxu0 0.0
  %129 = vmatpush.msra.mxu0 0.0
  %130 = vmatpush.msra.mxu0 0.0
  %131 = vmatpush.msra.mxu0 0.0
  %132 = vmatpush.msra.mxu0 0.0
  %133 = vmatpush.msra.mxu0 0.0
  %134 = vmatpush.msra.mxu0 0.0
  %135 = vmatpush.msra.mxu0 0.0
  %136 = vmatpush.msra.mxu0 0.0
  %137 = vmatpush.msra.mxu0 0.0
  %138 = vmatpush.msra.mxu0 %v117
  %139 = vmatpush.msra.mxu0 %v116
  %140 = vmatpush.msra.mxu0 %v115
  %141 = vmatpush.msra.mxu0 %v114
  %142 = vmatmul.f32.gmra.mxu0 %v124
  %v143 = vpop.f32.mrf.mxu0
  %v144 = vadd.f32 %v120, %v143
  %145 = vdwg.mxu0
  %v146 = vmax.f32 %v144, 0.0
  %v147 = vld [vmem:[%s7] sm:$0xff]
  %v148 = vld [vmem:[%s8] sm:$0x1]
  %v150 = vperm.slane %v148, 0
  %vm152 = vcmask 64512
  %v154 = vsel %vm152, %v146, 0
  %156 = vmatpush.msra.mxu0 0.0
  %157 = vmatpush.msra.mxu0 0.0
  %158 = vmatpush.msra.mxu0 0.0
  %159 = vmatpush.msra.mxu0 0.0
  %160 = vmatpush.msra.mxu0 0.0
  %161 = vmatpush.msra.mxu0 0.0
  %162 = vmatpush.msra.mxu0 0.0
  %163 = vmatpush.msra.mxu0 0.0
  %164 = vmatpush.msra.mxu0 0.0
  %165 = vmatpush.msra.mxu0 0.0
  %166 = vmatpush.msra.mxu0 0.0
  %167 = vmatpush.msra.mxu0 0.0
  %168 = vmatpush.msra.mxu0 0.0
  %169 = vmatpush.msra.mxu0 0.0
  %170 = vmatpush.msra.mxu0 0.0
  %171 = vmatpush.msra.mxu0 %v147
  %172 = vmatmul.f32.gmra.mxu0 %v154
  %v173 = vpop.f32.mrf.mxu0
  %v174 = vadd.f32 %v150, %v173
  %175 = vdwg.mxu0
  %vm176 = vcmask 15360
  %177 = vst.msk [vmem:[%s9] sm:$0xff] %vm176, %v174
  // Predicated region
  $region38: #{tpu_custom_call.1} parent=0 // pred_check
    _
  $region39: #{tpu_custom_call.1} parent=0 // pred_check_branch
    %179 = sbr.rel (0) target = $region41
  $region40: #{tpu_custom_call.1} parent=0 // pred_region
    _
  $region41: #{tpu_custom_call.1} parent=0 // pred_fallthru
    _
  // Predicated region
  $region42: #{tpu_custom_call.1} parent=0 // pred_check
    _
  $region43: #{tpu_custom_call.1} parent=0 // pred_check_branch
    %181 = sbr.rel (0) target = $region45
  $region44: #{tpu_custom_call.1} parent=0 // pred_region
    _
  $region45: #{tpu_custom_call.1} parent=0 // pred_fallthru
    _

</llo_original>
